<compile_context>
chip_gen: v7x
topology: tpu7x:2x2x1
jax: 0.10.0
libtpu: 0.0.40
codegen_flags: <defaults>
</compile_context>

<pallas_src>
import jax
import jax.numpy as jnp
from jax import lax
from jax.experimental import pallas as pl
from jax.experimental.pallas import tpu as pltpu


# ----------------------------- Pallas kernel -----------------------------

def _spd_conv_kernel(x_ref, w_ref, b_ref, o_ref):
    # x_ref: (tm, K) bf16   w_ref: (K, tn) bf16   b_ref: (1, tn) f32   o_ref: (tm, tn)
    y = jnp.dot(x_ref[...], w_ref[...], preferred_element_type=jnp.float32)
    y = y + b_ref[...]
    # SiLU: y * sigmoid(y); exp + approx reciprocal go to the (otherwise idle) EUP slot.
    silu = y * pl.reciprocal(1.0 + jnp.exp(-y), approx=True)
    o_ref[...] = silu.astype(o_ref.dtype)


def _select_tiles(M, K, C2, in_bytes, out_bytes, w_bytes, vmem_budget=12 * (1 << 20)):
    """Pick (tm, tn): lane-dense, weight-resident, VMEM-budgeted tiles."""
    # Column tile: keep all of C2 resident whenever reasonable (K = 4*c1 is tiny, so the
    # weight slab K*C2 is small); otherwise fall back to a 128-multiple.
    tn = C2 if C2 <= 2048 else 1024

    def vmem_est(tm_, tn_):
        # double-buffered activation/output tiles + (conservatively doubled) weight/bias
        return (2 * (tm_ * K * in_bytes + tm_ * tn_ * out_bytes)
                + 2 * (K * tn_ * w_bytes + tn_ * 4))

    tm = 1024
    while tm > 8 and vmem_est(tm, tn) > vmem_budget:
        tm //= 2
    tm = min(tm, M)
    if tm != M and tm % 8 != 0:
        tm = M                                  # full extent is always a legal block
    # Guarantee >= 2 row blocks so the "parallel" axis can be sharded across the two
    # v7x TensorCores (harmless on v5e/v6e).
    if M >= 16 and pl.cdiv(M, tm) < 2:
        tm = max(8, ((M // 2 + 7) // 8) * 8)
    return tm, tn


def fused_matmul_bn_silu(x, w_eff, b_eff, out_dtype):
    """SiLU(x @ w_eff + b_eff): x (M, K) bf16, w_eff (K, C2) bf16, b_eff (C2,) f32."""
    M, K = x.shape
    C2 = w_eff.shape[1]

    tm, tn = _select_tiles(
        M, K, C2,
        in_bytes=x.dtype.itemsize,
        out_bytes=jnp.dtype(out_dtype).itemsize,
        w_bytes=w_eff.dtype.itemsize)
    grid = (pl.cdiv(M, tm), pl.cdiv(C2, tn))

    cost = pl.CostEstimate(
        flops=2 * M * K * C2,
        transcendentals=M * C2,
        bytes_accessed=(M * K * x.dtype.itemsize
                        + K * C2 * w_eff.dtype.itemsize
                        + C2 * 4
                        + M * C2 * jnp.dtype(out_dtype).itemsize))

    return pl.pallas_call(
        _spd_conv_kernel,
        out_shape=jax.ShapeDtypeStruct((M, C2), out_dtype),
        grid=grid,
        in_specs=[
            pl.BlockSpec((tm, K), lambda i, j: (i, 0)),
            pl.BlockSpec((K, tn), lambda i, j: (0, j)),
            pl.BlockSpec((1, tn), lambda i, j: (0, j)),
        ],
        out_specs=pl.BlockSpec((tm, tn), lambda i, j: (i, j)),
        compiler_params=pltpu.CompilerParams(
            dimension_semantics=("parallel", "parallel"),
            vmem_limit_bytes=32 * (1 << 20)),
        cost_estimate=cost,
    )(x, w_eff, b_eff.reshape(1, C2))


# ----------------------------- wrapper / params -----------------------------

def spd_conv_forward(x_nchw, p, compute_dtype=jnp.bfloat16):
    """SPDConv.forward: space-to-depth (factor 2) + Conv(4*c1 -> c2) [+BN eval +SiLU]."""
    B, C1, H, W = x_nchw.shape
    assert H % 2 == 0 and W % 2 == 0, "SPDConv needs even spatial dims"
    H2, W2 = H // 2, W // 2
    C2 = p["w"].shape[1]
    K = 4 * C1

    # Space-to-depth fused into the single layout pass:
    # (B,C1,H,W) -> (B,C1,H2,2,W2,2) is metadata-only; one transpose lands the gathered
    # activation matrix directly (rows = (b,h2,w2), cols = (dh,dw,c1)); the bf16 cast
    # fuses into the same copy.
    x6 = x_nchw.reshape(B, C1, H2, 2, W2, 2)
    xg = jnp.transpose(x6, (0, 2, 4, 3, 5, 1))          # (B, H2, W2, 2, 2, C1)
    if xg.dtype != compute_dtype:
        xg = xg.astype(compute_dtype)
    xm = xg.reshape(B * H2 * W2, K)

    # Fold eval-mode BatchNorm into the bias-free 1x1 conv:
    #   y = x @ (W * s) + (beta - mean * s),  s = gamma / sqrt(var + eps)
    s = p["bn_g"] * lax.rsqrt(p["bn_var"] + p["bn_eps"])
    w_eff = p["w"] * s[None, :]                          # (4*C1, C2), torch-cat row order
    b_eff = (p["bn_b"] - p["bn_mean"] * s).astype(jnp.float32)

    # Permute weight rows from torch's cat order [(0,0),(1,0),(0,1),(1,1)] (= (dw,dh)
    # lexicographic) to the activation's (dh, dw, c1) order.  Free at fold time.
    w_perm = jnp.transpose(w_eff.reshape(2, 2, C1, C2), (1, 0, 2, 3)).reshape(K, C2)
    w_perm = w_perm.astype(compute_dtype)

    y = fused_matmul_bn_silu(xm, w_perm, b_eff, out_dtype=x_nchw.dtype)   # (M, C2)
    y = y.reshape(B, H2, W2, C2)
    return jnp.transpose(y, (0, 3, 1, 2))                # NHWC -> NCHW module interface


def init_params(key, c1, c2):
    k_w, k_g, k_b, k_m, k_v = jax.random.split(key, 5)
    c4 = 4 * c1
    return dict(
        # Conv2d(c1*4, c2, k=1, s=1, bias=False) weight stored as (cin, cout),
        # cin rows in the torch.cat quadrant order.
        w=0.2 * jax.random.normal(k_w, (c4, c2), jnp.float32),
        bn_g=1.0 + 0.1 * jax.random.normal(k_g, (c2,), jnp.float32),
        bn_b=0.1 * jax.random.normal(k_b, (c2,), jnp.float32),
        bn_mean=0.1 * jax.random.normal(k_m, (c2,), jnp.float32),
        bn_var=0.5 + jnp.abs(jax.random.normal(k_v, (c2,), jnp.float32)),
        bn_eps=1e-5,
    )


def spd_conv_reference(x_nchw, p):
    """Pure-JAX reference with the exact PyTorch-module semantics (eval-mode BN)."""
    xc = jnp.concatenate(
        [x_nchw[..., 0::2, 0::2], x_nchw[..., 1::2, 0::2],
         x_nchw[..., 0::2, 1::2], x_nchw[..., 1::2, 1::2]], axis=1)   # (B, 4*C1, H2, W2)
    s = p["bn_g"] * lax.rsqrt(p["bn_var"] + p["bn_eps"])
    w_eff = p["w"] * s[None, :]
    b_eff = p["bn_b"] - p["bn_mean"] * s
    y = jnp.einsum("bkhw,kc->bchw", xc, w_eff) + b_eff[None, :, None, None]
    return y * jax.nn.sigmoid(y)


# ----------------------------- main -----------------------------

if __name__ == "__main__":
    key = jax.random.PRNGKey(0)
    kx, kp = jax.random.split(key)

    B, C1, H, W = 2, 4, 16, 16      # -> space-to-depth gives (2, 16, 8, 8)
    C2 = 32

    x = jax.random.normal(kx, (B, C1, H, W), jnp.float32)
    params = init_params(kp, c1=C1, c2=C2)

    fwd = jax.jit(lambda inp: spd_conv_forward(inp, params))
    out = jax.block_until_ready(fwd(x))

    assert out.shape == (B, C2, H // 2, W // 2), out.shape
    assert bool(jnp.all(jnp.isfinite(out)))

    # Correctness vs. the exact module semantics (loose tol: bf16 MXU + approx recip).
    ref = spd_conv_reference(x, params)
    max_err = float(jnp.max(jnp.abs(out - ref)))
    scale = float(jnp.max(jnp.abs(ref))) + 1.0
    assert max_err < 5e-2 * scale, (max_err, scale)

    print("KERNEL_OK")
</pallas_src>

<mosaic_0001>
module attributes {stable_mosaic.version = 11 : i64} {
  func.func @_spd_conv_kernel(%arg0: i32, %arg1: i32, %arg2: memref<64x16xbf16, #tpu.memory_space<vmem>>, %arg3: memref<16x32xbf16, #tpu.memory_space<vmem>>, %arg4: memref<1x32xf32, #tpu.memory_space<vmem>>, %arg5: memref<64x32xf32, #tpu.memory_space<vmem>>) attributes {dimension_semantics = [#tpu.dimension_semantics<parallel>, #tpu.dimension_semantics<parallel>], iteration_bounds = array<i64: 2, 1>, scalar_prefetch = 0 : i64, scratch_operands = 0 : i64, tpu.core_type = #tpu.core_type<tc>, window_params = [{transform_indices = @transform_0, window_bounds = array<i64: 64, 16>}, {transform_indices = @transform_1, window_bounds = array<i64: 16, 32>}, {transform_indices = @transform_2, window_bounds = array<i64: 1, 32>}, {transform_indices = @transform_3, window_bounds = array<i64: 64, 32>}]} {
    %c0 = arith.constant 0 : index
    %c0_0 = arith.constant 0 : index
    %0 = vector.load %arg2[%c0, %c0_0] : memref<64x16xbf16, #tpu.memory_space<vmem>>, vector<64x16xbf16>
    %c0_1 = arith.constant 0 : index
    %c0_2 = arith.constant 0 : index
    %1 = vector.load %arg3[%c0_1, %c0_2] : memref<16x32xbf16, #tpu.memory_space<vmem>>, vector<16x32xbf16>
    %cst = arith.constant dense<0.000000e+00> : vector<64x32xf32>
    %2 = tpu.matmul %0, %1, %cst {dimension_numbers = #tpu.dot_dimension_numbers<[1], [0], [0], [1], [0, 0, 1, 1], [], []>} : vector<64x16xbf16>, vector<16x32xbf16>, vector<64x32xf32> -> vector<64x32xf32>
    %c0_3 = arith.constant 0 : index
    %c0_4 = arith.constant 0 : index
    %3 = vector.load %arg4[%c0_3, %c0_4] : memref<1x32xf32, #tpu.memory_space<vmem>>, vector<1x32xf32>
    %4 = vector.broadcast %3 : vector<1x32xf32> to vector<64x32xf32>
    %5 = arith.addf %2, %4 : vector<64x32xf32>
    %cst_5 = arith.constant 0.000000e+00 : f32
    %6 = vector.broadcast %cst_5 : f32 to vector<64x32xf32>
    %7 = arith.subf %6, %5 : vector<64x32xf32>
    %8 = math.exp %7 : vector<64x32xf32>
    %cst_6 = arith.constant 1.000000e+00 : f32
    %9 = vector.broadcast %cst_6 : f32 to vector<64x32xf32>
    %10 = arith.addf %9, %8 : vector<64x32xf32>
    %11 = tpu.reciprocal %10 {approx = true} : vector<64x32xf32> -> vector<64x32xf32>
    %12 = arith.mulf %5, %11 : vector<64x32xf32>
    %c0_7 = arith.constant 0 : index
    %c0_8 = arith.constant 0 : index
    %13 = vector.load %arg5[%c0_7, %c0_8] : memref<64x32xf32, #tpu.memory_space<vmem>>, vector<64x32xf32>
    tpu.vector_store %arg5[%c0_7, %c0_8], %12 {strides = array<i32>} : memref<64x32xf32, #tpu.memory_space<vmem>>, vector<64x32xf32>,
    return
  }
  func.func @transform_0(%arg0: i32, %arg1: i32) -> (i32, i32) {
    %c0_i32 = arith.constant 0 : i32
    %c0_i32_0 = arith.constant 0 : i32
    return %arg0, %c0_i32 : i32, i32
  }
  func.func @transform_1(%arg0: i32, %arg1: i32) -> (i32, i32) {
    %c0_i32 = arith.constant 0 : i32
    %c0_i32_0 = arith.constant 0 : i32
    return %c0_i32, %arg1 : i32, i32
  }
  func.func @transform_2(%arg0: i32, %arg1: i32) -> (i32, i32) {
    %c0_i32 = arith.constant 0 : i32
    %c0_i32_0 = arith.constant 0 : i32
    return %c0_i32, %arg1 : i32, i32
  }
  func.func @transform_3(%arg0: i32, %arg1: i32) -> (i32, i32) {
    %c0_i32 = arith.constant 0 : i32
    return %arg0, %arg1 : i32, i32
  }
}

</mosaic_0001>

<llo_original>
// kernel: _lambda_.1
$region0: #{_lambda_.1}
  #allocation0 [shape = 'u32[]', space=smem, size = 0x4, offset = 0x4, fixed_abs, tag = 'smem constant byte address 0x4 - core index']
  #allocation1 [shape = 'u32[144,128]{1,0:T(1,128)}', space=vmem, size = 0x12000, scoped, tag = 'internal scratch']
  %s0 = inlined_call_operand.vmem [shape: bf16[128,16], index: 0, kind: input, shape index: {}]
  %s1 = inlined_call_operand.vmem [shape: bf16[16,32], index: 1, kind: input, shape index: {}]
  %s2 = inlined_call_operand.vmem [shape: f32[1,32], index: 2, kind: input, shape index: {}]
  %s3 = inlined_call_operand.hbm [shape: f32[128,32], index: 3, kind: output, shape index: {}]
  %s4 = sld [smem:[#allocation0]]
  $region45: #{_lambda_.1} parent=0
    _
  %s6 = ssub.s32 1, %s4
  %s7 = scalar_select 0, %s6, %s4
  $region1: #{_lambda_.1} parent=0
    #allocation2 [shape = 'u8[65536]{0}', space=vmem, size = 0x10000, scoped, tag = 'output window, operand 0']
    #allocation3 [shape = 's32[2]{0}', space=sflag, size = 0x8, scoped, tag = 'scoped memory for _lambda_.1']
    %8 = vsyncpa [#allocation3], 0
    %s9 = scalar_lea.sflag [#allocation3], 1
    %10 = vsyncpa %s9, 0
    loop: start=0, step=1, limit=4
    $region2: #{_lambda_.1} parent=1 // loop_pre_header
      _
    $region3: #{_lambda_.1} parent=1 // loop_header
      %s12 = sphi 0, %s16
      %p13 = scmp.ge.s32.totalorder %s12, 4
      %s19 = sphi 0, %s31
      %s20 = sphi 0, %s27
      %s21 = sphi 0, %s19
      %s22 = sphi 0, %s20
      %s23 = sphi 0, %s21
      %s24 = sphi 0, %s22
      %s34 = sphi 0, %s36
      %s37 = sphi 0, %s34
      %s38 = sphi 0, %s37
      %s54 = sphi 0, %s38
      %s60 = sphi 0, %s62
      %s63 = sphi 0, %s60
      %s64 = sphi 0, %s63
      %s80 = sphi 0, %s64
      %s86 = sphi 0, %s88
      %s89 = sphi 0, %s86
      %s90 = sphi 0, %s89
      %s106 = sphi 0, %s90
      %s114 = sphi 0, %s116
      %s117 = sphi 0, %s114
      %s118 = sphi 0, %s117
      %s134 = sphi 0, %s118
    $region4: #{_lambda_.1} parent=1 // loop_header_branch
      %15 = sbr.rel (%p13) target = $region8
    $region5: #{_lambda_.1} parent=1 // loop_body
      %s17 = ssub.s32 %s12, 1
      %s18 = ssub.s32 %s12, 2
      %s25 = sadd.s32 1, %s20
      %p26 = scmp.ge.s32.totalorder %s25, 1
      %s27 = scalar_select %p26, 0, %s25
      %s28 = sadd.s32 1, %s19
      %s29 = scalar_select %p26, %s28, %s19
      %p30 = scmp.ge.s32.totalorder %s29, 2
      %s31 = scalar_select %p30, 0, %s29
      %s32 = ssub.s32 %s19, %s31
      %p33 = scmp.eq.s32.totalorder %s32, 0
      %s35 = sadd.s32 %s34, 1
      %s36 = scalar_select %p33, %s34, %s35
      %p39 = pneg %p33
      %p40 = scmp.eq.s32.totalorder %s12, 1
      %p41 = por %p39, %p40
      %p42 = scmp.ne.s32.totalorder %s34, %s37
      %p43 = scmp.eq.s32.totalorder %s12, 0
      %p44 = por %p42, %p43
      %p45 = scmp.ne.s32.totalorder %s34, %s37
      %p46 = scmp.eq.s32.totalorder %s17, 1
      %p47 = por %p45, %p46
      %p48 = scmp.ne.s32.totalorder %s37, %s38
      %p49 = scmp.eq.s32.totalorder %s17, 0
      %p50 = por %p48, %p49
      %p51 = scmp.ne.s32.totalorder %s37, %s38
      %p52 = scmp.eq.s32.totalorder %s18, 1
      %p53 = por %p51, %p52
      %p55 = scmp.ne.s32.totalorder %s38, %s54
      %p56 = scmp.eq.s32.totalorder %s18, 0
      %p57 = por %p55, %p56
      %s58 = ssub.s32 %s20, %s27
      %p59 = scmp.eq.s32.totalorder %s58, 0
      %s61 = sadd.s32 %s60, 1
      %s62 = scalar_select %p59, %s60, %s61
      %p65 = pneg %p59
      %p66 = scmp.eq.s32.totalorder %s12, 1
      %p67 = por %p65, %p66
      %p68 = scmp.ne.s32.totalorder %s60, %s63
      %p69 = scmp.eq.s32.totalorder %s12, 0
      %p70 = por %p68, %p69
      %p71 = scmp.ne.s32.totalorder %s60, %s63
      %p72 = scmp.eq.s32.totalorder %s17, 1
      %p73 = por %p71, %p72
      %p74 = scmp.ne.s32.totalorder %s63, %s64
      %p75 = scmp.eq.s32.totalorder %s17, 0
      %p76 = por %p74, %p75
      %p77 = scmp.ne.s32.totalorder %s63, %s64
      %p78 = scmp.eq.s32.totalorder %s18, 1
      %p79 = por %p77, %p78
      %p81 = scmp.ne.s32.totalorder %s64, %s80
      %p82 = scmp.eq.s32.totalorder %s18, 0
      %p83 = por %p81, %p82
      %s84 = ssub.s32 %s20, %s27
      %p85 = scmp.eq.s32.totalorder %s84, 0
      %s87 = sadd.s32 %s86, 1
      %s88 = scalar_select %p85, %s86, %s87
      %p91 = pneg %p85
      %p92 = scmp.eq.s32.totalorder %s12, 1
      %p93 = por %p91, %p92
      %p94 = scmp.ne.s32.totalorder %s86, %s89
      %p95 = scmp.eq.s32.totalorder %s12, 0
      %p96 = por %p94, %p95
      %p97 = scmp.ne.s32.totalorder %s86, %s89
      %p98 = scmp.eq.s32.totalorder %s17, 1
      %p99 = por %p97, %p98
      %p100 = scmp.ne.s32.totalorder %s89, %s90
      %p101 = scmp.eq.s32.totalorder %s17, 0
      %p102 = por %p100, %p101
      %p103 = scmp.ne.s32.totalorder %s89, %s90
      %p104 = scmp.eq.s32.totalorder %s18, 1
      %p105 = por %p103, %p104
      %p107 = scmp.ne.s32.totalorder %s90, %s106
      %p108 = scmp.eq.s32.totalorder %s18, 0
      %p109 = por %p107, %p108
      %s110 = ssub.s32 %s19, %s31
      %s111 = ssub.s32 %s20, %s27
      %s112 = sor.u32 %s110, %s111
      %p113 = scmp.eq.s32.totalorder %s112, 0
      %s115 = sadd.s32 %s114, 1
      %s116 = scalar_select %p113, %s114, %s115
      %p119 = pneg %p113
      %p120 = scmp.eq.s32.totalorder %s12, 1
      %p121 = por %p119, %p120
      %p122 = scmp.ne.s32.totalorder %s114, %s117
      %p123 = scmp.eq.s32.totalorder %s12, 0
      %p124 = por %p122, %p123
      %p125 = scmp.ne.s32.totalorder %s114, %s117
      %p126 = scmp.eq.s32.totalorder %s17, 1
      %p127 = por %p125, %p126
      %p128 = scmp.ne.s32.totalorder %s117, %s118
      %p129 = scmp.eq.s32.totalorder %s17, 0
      %p130 = por %p128, %p129
      %p131 = scmp.ne.s32.totalorder %s117, %s118
      %p132 = scmp.eq.s32.totalorder %s18, 1
      %p133 = por %p131, %p132
      %p135 = scmp.ne.s32.totalorder %s118, %s134
      %p136 = scmp.eq.s32.totalorder %s18, 0
      %p137 = por %p135, %p136
      %p138 = scmp.le.s32.totalorder 1, %s12
      %p139 = scmp.lt.s32.totalorder %s12, 3
      %p140 = pnand %p138, %p139
      %p141 = pneg %p140
      // Predicated region
      $region9: #{_lambda_.1} parent=5 // pred_check
        _
      $region10: #{_lambda_.1} parent=5 // pred_check_branch
        %143 = sbr.rel (%p140) target = $region12
      $region11: #{_lambda_.1} parent=5 // pred_region
        %s144 = ssub.s32 %s12, 1
        // Predicated region
        $region13: #{_lambda_.1} parent=11 // pred_check
          %p145 = pneg %p76
        $region14: #{_lambda_.1} parent=11 // pred_check_branch
          %147 = sbr.rel (%p145) target = $region16
        $region15: #{_lambda_.1} parent=11 // pred_region
          %p148 = scmp.lt.s32.totalorder %s22, 0
          %s149 = scalar_select %p148, %s22, 0
          %s150 = smul.addr %s149, 4
          %s151 = scalar_lea.vmem %s1, %s150
        $region16: #{_lambda_.1} parent=11 // pred_fallthru
          _
        // Predicated region
        $region17: #{_lambda_.1} parent=11 // pred_check
          %p152 = pneg %p102
        $region18: #{_lambda_.1} parent=11 // pred_check_branch
          %154 = sbr.rel (%p152) target = $region20
        $region19: #{_lambda_.1} parent=11 // pred_region
          %p155 = scmp.lt.s32.totalorder %s22, 0
          %s156 = scalar_select %p155, %s22, 0
          %s157 = scalar_lea.vmem %s2, %s156
        $region20: #{_lambda_.1} parent=11 // pred_fallthru
          _
      $region12: #{_lambda_.1} parent=5 // pred_fallthru
        _
      %p158 = scmp.lt.s32.totalorder %s12, 2
      // Predicated region
      $region21: #{_lambda_.1} parent=5 // pred_check
        %p159 = pneg %p158
      $region22: #{_lambda_.1} parent=5 // pred_check_branch
        %161 = sbr.rel (%p159) target = $region24
      $region23: #{_lambda_.1} parent=5 // pred_region
        // Predicated region
        $region25: #{_lambda_.1} parent=23 // pred_check
          %p162 = pneg %p44
        $region26: #{_lambda_.1} parent=23 // pred_check_branch
          %164 = sbr.rel (%p162) target = $region28
        $region27: #{_lambda_.1} parent=23 // pred_region
          %s165 = smul.u32 8, %s19
          %p166 = scmp.lt.s32.totalorder %s165, 15
          %s167 = scalar_select %p166, %s165, 15
          %s168 = smul.addr %s167, 4
          %s169 = scalar_lea.vmem %s0, %s168
          %s170 = smul.u32 8, %s19
        $region28: #{_lambda_.1} parent=23 // pred_fallthru
          _
      $region24: #{_lambda_.1} parent=5 // pred_fallthru
        _
      %p171 = scmp.le.s32.totalorder 1, %s12
      %p172 = scmp.lt.s32.totalorder %s12, 3
      %p173 = pnand %p171, %p172
      %p174 = pneg %p173
      // Predicated region
      $region29: #{_lambda_.1} parent=5 // pred_check
        _
      $region30: #{_lambda_.1} parent=5 // pred_check_branch
        %176 = sbr.rel (%p173) target = $region32
      $region31: #{_lambda_.1} parent=5 // pred_region
        %s177 = ssub.s32 %s12, 1
        %s178 = smul.u32 8, %s21
        %p179 = scmp.lt.s32.totalorder %s178, 15
        %s180 = scalar_select %p179, %s178, 15
        %s181 = smul.addr %s180, 4
        %s182 = scalar_lea.vmem %s0, %s181
        %p183 = pneg %p50
        %p184 = pneg %p47
        %p185 = scmp.lt.s32.totalorder %s22, 0
        %s186 = scalar_select %p185, %s22, 0
        %s187 = smul.addr %s186, 4
        %s188 = scalar_lea.vmem %s1, %s187
        %p189 = pneg %p76
        %p190 = pneg %p73
        %p191 = scmp.lt.s32.totalorder %s22, 0
        %s192 = scalar_select %p191, %s22, 0
        %s193 = scalar_lea.vmem %s2, %s192
        %p194 = pneg %p102
        %p195 = pneg %p99
        %p196 = pneg %p130
        %p197 = pneg %p127
        %s198 = sand.u32 %s117, 1
        %s199 = scalar_lea.sflag [#allocation3], %s198
        %s200 = sand.u32 %s117, 1
        %s201 = smul.addr %s200, 64
        %s202 = scalar_lea.vmem [#allocation2], %s201
        %s203 = smul.u32 8, %s21
        %p204 = scmp.lt.s32.totalorder %s203, 15
        %s205 = scalar_select %p204, %s203, 15
        %s206 = smul.addr %s205, 4
        %s207 = scalar_lea.vmem %s0, %s206
        %s208 = smul.u32 8, %s21
        %p209 = scmp.lt.s32.totalorder %s22, 0
        %s210 = scalar_select %p209, %s22, 0
        %s211 = smul.addr %s210, 4
        %s212 = scalar_lea.vmem %s1, %s211
        %p213 = scmp.lt.s32.totalorder %s22, 0
        %s214 = scalar_select %p213, %s22, 0
        %s215 = scalar_lea.vmem %s2, %s214
        %s216 = smul.u32 8, %s21
        %v218 = vld [vmem:[%s207] sm:$0xf]
        %v219 = vld [vmem:[%s207 + $0x4] sm:$0xf]
        %v220 = vld [vmem:[%s207 + $0x8] sm:$0xf]
        %v221 = vld [vmem:[%s207 + $0xc] sm:$0xf]
        %v222 = vld [vmem:[%s207 + $0x10] sm:$0xf]
        %v223 = vld [vmem:[%s207 + $0x14] sm:$0xf]
        %v224 = vld [vmem:[%s207 + $0x18] sm:$0xf]
        %v225 = vld [vmem:[%s207 + $0x1c] sm:$0xf]
        %v226 = vld [vmem:[%s212] sm:$0xf]
        %v227 = vld [vmem:[%s212 + $0x4] sm:$0xf]
        %v228 = vld [vmem:[%s215] sm:$0x1]
        %v230 = vlaneseq
        %v231 = vshrl.u32 %v230, 7
        %v232 = vsub.s32 0, %v231
        %v233 = vrot.slane %v228, %v232
        %v243 = vunpack.c.l.b16 %v218
        %v244 = vunpack.c.l.b16 %v219
        %v245 = vunpack.c.l.b16 %v220
        %v246 = vunpack.c.l.b16 %v221
        %v247 = vunpack.c.l.b16 %v222
        %v248 = vunpack.c.l.b16 %v223
        %v249 = vunpack.c.l.b16 %v224
        %v250 = vunpack.c.l.b16 %v225
        %v251 = vpack.c.b16 %v244, %v243
        %v252 = vpack.c.b16 %v246, %v245
        %v253 = vpack.c.b16 %v248, %v247
        %v254 = vpack.c.b16 %v250, %v249
        %v257 = vunpack.c.l.b16 %v226
        %v258 = vunpack.c.l.b16 %v227
        %v259 = vpack.c.b16 %v258, %v257
        %vm261 = vcmask 130048
        %v263 = vsel %vm261, %v251, 0
        %v266 = vsel %vm261, %v252, 0
        %v269 = vsel %vm261, %v253, 0
        %v272 = vsel %vm261, %v254, 0
        %274 = vmatprep.subr.bf16.mxu0 0
        %275 = vmatpush1.bf16.msra.mxu0 %v259
        %276 = vmatprep.subr.bf16.mxu0 0
        %277 = vmatpush1.bf16.msra.mxu0 0
        %278 = vmatprep.subr.bf16.mxu0 0
        %279 = vmatpush1.bf16.msra.mxu0 0
        %280 = vmatprep.subr.bf16.mxu0 0
        %281 = vmatpush1.bf16.msra.mxu0 0
        %282 = vmatprep.subr.bf16.mxu0 0
        %283 = vmatpush1.bf16.msra.mxu0 0
        %284 = vmatprep.subr.bf16.mxu0 0
        %285 = vmatpush1.bf16.msra.mxu0 0
        %286 = vmatprep.subr.bf16.mxu0 0
        %287 = vmatpush1.bf16.msra.mxu0 0
        %288 = vmatprep.subr.bf16.mxu0 0
        %289 = vmatpush1.bf16.msra.mxu0 0
        %290 = vmatprep.subr.bf16.mxu0 0
        %291 = vmatpush1.bf16.msra.mxu0 0
        %292 = vmatprep.subr.bf16.mxu0 0
        %293 = vmatpush1.bf16.msra.mxu0 0
        %294 = vmatprep.subr.bf16.mxu0 0
        %295 = vmatpush1.bf16.msra.mxu0 0
        %296 = vmatprep.subr.bf16.mxu0 0
        %297 = vmatpush1.bf16.msra.mxu0 0
        %298 = vmatprep.subr.bf16.mxu0 0
        %299 = vmatpush1.bf16.msra.mxu0 0
        %300 = vmatprep.subr.bf16.mxu0 0
        %301 = vmatpush1.bf16.msra.mxu0 0
        %302 = vmatprep.subr.bf16.mxu0 0
        %303 = vmatpush1.bf16.msra.mxu0 0
        %304 = vmatprep.subr.bf16.mxu0 0
        %305 = vmatpush1.bf16.msra.mxu0 0
        %306 = vmatprep.mubr.bf16.mxu0 0
        %307 = vmatmul.mubr.bf16.gmra.mrb[0].mxu0 %v263
        %v308 = vpop.f32.mrb[0].mxu0
        %v309 = vadd.f32 %v233, %v308
        %v310 = vpop.f32.mrb[0].mxu0
        %v311 = vpop.f32.mrb[0].mxu0
        %v312 = vadd.f32 %v233, %v311
        %v313 = vpop.f32.mrb[0].mxu0
        %314 = vmatprep.mubr.bf16.mxu0 0
        %315 = vmatmul.mubr.bf16.gmra.mrb[0].mxu0 %v266
        %v316 = vpop.f32.mrb[0].mxu0
        %v317 = vadd.f32 %v233, %v316
        %v318 = vpop.f32.mrb[0].mxu0
        %v319 = vpop.f32.mrb[0].mxu0
        %v320 = vadd.f32 %v233, %v319
        %v321 = vpop.f32.mrb[0].mxu0
        %322 = vmatprep.mubr.bf16.mxu0 0
        %323 = vmatmul.mubr.bf16.gmra.mrb[0].mxu0 %v269
        %v324 = vpop.f32.mrb[0].mxu0
        %v325 = vadd.f32 %v233, %v324
        %v326 = vpop.f32.mrb[0].mxu0
        %v327 = vpop.f32.mrb[0].mxu0
        %v328 = vadd.f32 %v233, %v327
        %v329 = vpop.f32.mrb[0].mxu0
        %330 = vmatprep.mubr.bf16.mxu0 0
        %331 = vmatmul.mubr.bf16.gmra.mrb[0].mxu0 %v272
        %v332 = vpop.f32.mrb[0].mxu0
        %v333 = vadd.f32 %v233, %v332
        %v334 = vpop.f32.mrb[0].mxu0
        %v335 = vpop.f32.mrb[0].mxu0
        %v336 = vadd.f32 %v233, %v335
        %v337 = vpop.f32.mrb[0].mxu0
        %338 = vdwg.mxu0
        %v339 = vsub.f32 0.0, %v309
        %v340 = vsub.f32 0.0, %v312
        %v341 = vsub.f32 0.0, %v317
        %v342 = vsub.f32 0.0, %v320
        %v343 = vsub.f32 0.0, %v325
        %v344 = vsub.f32 0.0, %v328
        %v345 = vsub.f32 0.0, %v333
        %v346 = vsub.f32 0.0, %v336
        %v347 = vmul.f32 %v339, 1.442695
        %v348 = vpow.pop %v347
        %v349 = vmul.f32 %v340, 1.442695
        %v350 = vpow.pop %v349
        %v351 = vmul.f32 %v341, 1.442695
        %v352 = vpow.pop %v351
        %v353 = vmul.f32 %v342, 1.442695
        %v354 = vpow.pop %v353
        %v355 = vmul.f32 %v343, 1.442695
        %v356 = vpow.pop %v355
        %v357 = vmul.f32 %v344, 1.442695
        %v358 = vpow.pop %v357
        %v359 = vmul.f32 %v345, 1.442695
        %v360 = vpow.pop %v359
        %v361 = vmul.f32 %v346, 1.442695
        %v362 = vpow.pop %v361
        %v363 = vadd.f32 %v348, 1.0
        %v364 = vadd.f32 %v350, 1.0
        %v365 = vadd.f32 %v352, 1.0
        %v366 = vadd.f32 %v354, 1.0
        %v367 = vadd.f32 %v356, 1.0
        %v368 = vadd.f32 %v358, 1.0
        %v369 = vadd.f32 %v360, 1.0
        %v370 = vadd.f32 %v362, 1.0
        %v371 = vrcp.pop %v363
        %v372 = vrcp.pop %v364
        %v373 = vrcp.pop %v365
        %v374 = vrcp.pop %v366
        %v375 = vrcp.pop %v367
        %v376 = vrcp.pop %v368
        %v377 = vrcp.pop %v369
        %v378 = vrcp.pop %v370
        %v379 = vmul.f32 %v309, %v371
        %v380 = vmul.f32 %v312, %v372
        %v381 = vmul.f32 %v317, %v373
        %v382 = vmul.f32 %v320, %v374
        %v383 = vmul.f32 %v325, %v375
        %v384 = vmul.f32 %v328, %v376
        %v385 = vmul.f32 %v333, %v377
        %v386 = vmul.f32 %v336, %v378
        %vm387 = vcmask 261120
        %388 = vst.msk [vmem:[%s202] sm:$0xff] %vm387, %v379
        %389 = vst.msk [vmem:[%s202 + $0x8] sm:$0xff] %vm387, %v380
        %390 = vst.msk [vmem:[%s202 + $0x10] sm:$0xff] %vm387, %v381
        %391 = vst.msk [vmem:[%s202 + $0x18] sm:$0xff] %vm387, %v382
        %392 = vst.msk [vmem:[%s202 + $0x20] sm:$0xff] %vm387, %v383
        %393 = vst.msk [vmem:[%s202 + $0x28] sm:$0xff] %vm387, %v384
        %394 = vst.msk [vmem:[%s202 + $0x30] sm:$0xff] %vm387, %v385
        %395 = vst.msk [vmem:[%s202 + $0x38] sm:$0xff] %vm387, %v386
        %s396 = sand.u32 %s117, 1
        %s397 = scalar_lea.sflag [#allocation3], %s396
        %s398 = sand.u32 %s117, 1
        %s399 = smul.addr %s398, 64
        %s400 = scalar_lea.vmem [#allocation2], %s399
        // Predicated region
        $region33: #{_lambda_.1} parent=31 // pred_check
          %p401 = pneg %p127
        $region34: #{_lambda_.1} parent=31 // pred_check_branch
          %403 = sbr.rel (%p401) target = $region36
        $region35: #{_lambda_.1} parent=31 // pred_region
          %s404 = smul.u32 8, %s21
          %s406 = ssub.s32 1024, 1024
          %407 = vsyncadd %s397, %s406
          %s408 = sadd.s32 %s22, %s404
          %s409 = smul.addr %s408, 128
          %s410 = scalar_lea.hbm %s3, %s409
          %s411 = sshll.u32 %s400, 4
          %s412 = int_to_ptr.vmem [resolvable:$true] %s411
          %417 = dma.vmem_to_hbm [thread:$0]  %s412, 1024, %s410, %s397, 128, 128, 8
        $region36: #{_lambda_.1} parent=31 // pred_fallthru
          _
      $region32: #{_lambda_.1} parent=5 // pred_fallthru
        _
      %p418 = scmp.le.s32.totalorder 2, %s12
      // Predicated region
      $region37: #{_lambda_.1} parent=5 // pred_check
        %p419 = pneg %p418
      $region38: #{_lambda_.1} parent=5 // pred_check_branch
        %421 = sbr.rel (%p419) target = $region40
      $region39: #{_lambda_.1} parent=5 // pred_region
        %s422 = ssub.s32 %s12, 2
        // Predicated region
        $region41: #{_lambda_.1} parent=39 // pred_check
          %p423 = pneg %p133
        $region42: #{_lambda_.1} parent=39 // pred_check_branch
          %425 = sbr.rel (%p423) target = $region44
        $region43: #{_lambda_.1} parent=39 // pred_region
          %s426 = sand.u32 %s118, 1
          %s427 = scalar_lea.sflag [#allocation3], %s426
          %s428 = sand.u32 %s118, 1
          %s429 = smul.addr %s428, 64
          %s430 = scalar_lea.vmem [#allocation2], %s429
          %431 = dma.done %s427, 1024
        $region44: #{_lambda_.1} parent=39 // pred_fallthru
          _
      $region40: #{_lambda_.1} parent=5 // pred_fallthru
        _
    $region6: #{_lambda_.1} parent=1 // loop_footer
      %s16 = sadd.s32 1, %s12
    $region7: #{_lambda_.1} parent=1 // loop_footer_branch
      %11 = sbr.rel target = $region3
    $region8: #{_lambda_.1} parent=1 // loop_exit
      _
    %432 = vsyncpa [#allocation3], 1
    %s433 = scalar_lea.sflag [#allocation3], 1
    %434 = vsyncpa %s433, 1

</llo_original>
